<compile_context>
chip_gen: v6e
topology: v6e:2x2x1
jax: 0.10.0
libtpu: 0.0.40
codegen_flags: <defaults>
</compile_context>

<pallas_src>
import functools

import jax
import jax.numpy as jnp
from jax.experimental import pallas as pl
from jax.experimental.pallas import tpu as pltpu

GAMMA = -0.1
ZETA = 1.1
_LANE = 128          # lane tile (fast axis); full lanes -> unmasked stores
_TILE_ROWS = 1024    # sublane rows per grid step (~512 KiB f32 per buffer)


def _adaround_kernel(scale_ref, zp_ref, x_ref, o_ref, *, quant_min, quant_max):
    # scale / zero_point are SMEM scalars (runtime values, no recompile).
    scale = scale_ref[0]
    zp = zp_ref[0]
    # Compute in f32 regardless of storage dtype (VPU cast is free filler).
    x = x_ref[...].astype(jnp.float32)
    xs = x / scale
    # x_floor + soft_target(init_alpha(x)) == xs exactly (see identity above).
    q = jnp.clip(jnp.round(xs + zp), quant_min, quant_max)
    o_ref[...] = ((q - zp) * scale).astype(o_ref.dtype)


def adaround_forward(x, *, bit=8, scale=1.0, zero_point=0.0,
                     tile_rows=_TILE_ROWS):
    """Fake-quant forward of AdaRoundQuantizer (first call, ptq=False)."""
    quant_min = float(-(1 << (bit - 1)))
    quant_max = float((1 << (bit - 1)) - 1)

    orig_shape = x.shape
    orig_dtype = x.dtype
    n = x.size
    itemsize = jnp.dtype(orig_dtype).itemsize

    # Native sublane tile depth for this dtype: f32 -> 8, bf16 -> 16, int8 -> 32.
    sub = 8 * max(1, 4 // itemsize)
    block_elems = sub * _LANE

    # Flatten (metadata-only for contiguous arrays) and present lane-dense
    # (rows, 128) tiles. Keep storage dtype; kernel upcasts internally.
    flat = x.reshape(-1)
    n_pad = pl.cdiv(n, block_elems) * block_elems
    padded = n_pad != n
    if padded:
        # TODO(synk): handle ragged tails with a masked final block instead of
        # a full pad copy; for typical NCHW activations this branch never runs.
        flat = jnp.pad(flat, (0, n_pad - n))
    x2d = flat.reshape(-1, _LANE)
    rows = x2d.shape[0]

    # Row tile: as large as possible (<= tile_rows); rows and tile_rows are
    # both multiples of `sub`, so the block stays on native tiles.
    tr = min(tile_rows, rows)
    grid = (pl.cdiv(rows, tr),)

    cost = pl.CostEstimate(
        flops=6 * n,
        transcendentals=0,
        bytes_accessed=2 * n * itemsize,
    )

    kernel = functools.partial(
        _adaround_kernel,
        quant_min=quant_min,
        quant_max=quant_max,
    )

    scale_arr = jnp.asarray([scale], dtype=jnp.float32)
    zp_arr = jnp.asarray([zero_point], dtype=jnp.float32)

    out2d = pl.pallas_call(
        kernel,
        out_shape=jax.ShapeDtypeStruct((rows, _LANE), orig_dtype),
        grid=grid,
        in_specs=[
            pl.BlockSpec(memory_space=pltpu.MemorySpace.SMEM),   # scale
            pl.BlockSpec(memory_space=pltpu.MemorySpace.SMEM),   # zero_point
            pl.BlockSpec((tr, _LANE), lambda i: (i, 0)),
        ],
        out_specs=pl.BlockSpec((tr, _LANE), lambda i: (i, 0)),
        compiler_params=pltpu.CompilerParams(
            dimension_semantics=("parallel",)),
        cost_estimate=cost,
    )(scale_arr, zp_arr, x2d)

    out = out2d.reshape(-1)
    if padded:
        out = out[:n]
    return out.reshape(orig_shape)


def _reference_simplified(x, *, bit=8, scale=1.0, zero_point=0.0):
    """Mathematically identical closed form of the first-call forward."""
    quant_min = float(-(1 << (bit - 1)))
    quant_max = float((1 << (bit - 1)) - 1)
    xs = x.astype(jnp.float32) / scale
    q = jnp.clip(jnp.round(xs + zero_point), quant_min, quant_max)
    return ((q - zero_point) * scale).astype(x.dtype)


def _reference_torch_path(x, *, bit=8, scale=1.0, zero_point=0.0):
    """Literal transcription of the PyTorch module's log/sigmoid path."""
    quant_min = float(-(1 << (bit - 1)))
    quant_max = float((1 << (bit - 1)) - 1)
    xs = x.astype(jnp.float32) / scale
    x_floor = jnp.floor(xs)
    rest = xs - x_floor
    alpha = -jnp.log((ZETA - GAMMA) / (rest - GAMMA) - 1.0)
    h = jnp.clip(jax.nn.sigmoid(alpha) * (ZETA - GAMMA) + GAMMA, 0.0, 1.0)
    q = jnp.clip(jnp.round(x_floor + h + zero_point), quant_min, quant_max)
    return ((q - zero_point) * scale).astype(x.dtype)


if __name__ == "__main__":
    key = jax.random.PRNGKey(0)
    # NCHW activation, as a PyTorch conv would see it.
    x = jax.random.normal(key, (2, 4, 16, 16), dtype=jnp.float32) * 3.0

    # Module buffer defaults: scale=1.0, zero_point=0.0, bit=8 -> [-128, 127]
    out = adaround_forward(x, bit=8, scale=1.0, zero_point=0.0)
    out = jax.block_until_ready(out)

    assert out.shape == x.shape and out.dtype == x.dtype

    # Exact check against the analytically-equivalent closed form.
    ref = _reference_simplified(x, bit=8, scale=1.0, zero_point=0.0)
    assert jnp.allclose(out, ref, atol=1e-5, rtol=1e-5)

    # Sanity check against the literal log/sigmoid path: identical except for
    # possible float round-trip flips exactly at .5 rounding boundaries, which
    # can differ by at most one quantization step (= scale).
    ref_full = _reference_torch_path(x, bit=8, scale=1.0, zero_point=0.0)
    assert jnp.max(jnp.abs(out - ref_full)) <= 1.0 + 1e-5

    # Second call with a different scale exercises the runtime-SMEM-scalar
    # path (same compiled kernel, new qparams, as a PTQ sweep would do).
    out2 = jax.block_until_ready(
        adaround_forward(x, bit=8, scale=0.05, zero_point=3.0))
    ref2 = _reference_simplified(x, bit=8, scale=0.05, zero_point=3.0)
    assert jnp.allclose(out2, ref2, atol=1e-5, rtol=1e-5)

    print("KERNEL_OK")
</pallas_src>

<mosaic_0001>
module attributes {stable_mosaic.version = 11 : i64} {
  func.func @_adaround_kernel(%arg0: i32, %arg1: memref<1xf32, #tpu.memory_space<smem>>, %arg2: memref<1xf32, #tpu.memory_space<smem>>, %arg3: memref<16x128xf32, #tpu.memory_space<vmem>>, %arg4: memref<16x128xf32, #tpu.memory_space<vmem>>) attributes {dimension_semantics = [#tpu.dimension_semantics<parallel>], iteration_bounds = array<i64: 1>, scalar_prefetch = 0 : i64, scratch_operands = 0 : i64, tpu.core_type = #tpu.core_type<tc>, window_params = [{transform_indices = @transform_0, window_bounds = array<i64: 1>}, {transform_indices = @transform_1, window_bounds = array<i64: 1>}, {transform_indices = @transform_2, window_bounds = array<i64: 16, 128>}, {transform_indices = @transform_3, window_bounds = array<i64: 16, 128>}]} {
    %c0 = arith.constant 0 : index
    %0 = memref.load %arg1[%c0] : memref<1xf32, #tpu.memory_space<smem>>
    %c0_0 = arith.constant 0 : index
    %1 = memref.load %arg2[%c0_0] : memref<1xf32, #tpu.memory_space<smem>>
    %c0_1 = arith.constant 0 : index
    %c0_2 = arith.constant 0 : index
    %2 = vector.load %arg3[%c0_1, %c0_2] : memref<16x128xf32, #tpu.memory_space<vmem>>, vector<16x128xf32>
    %3 = vector.broadcast %0 : f32 to vector<16x128xf32>
    %4 = arith.divf %2, %3 : vector<16x128xf32>
    %5 = vector.broadcast %1 : f32 to vector<16x128xf32>
    %6 = arith.addf %4, %5 : vector<16x128xf32>
    %7 = math.roundeven %6 : vector<16x128xf32>
    %cst = arith.constant -1.280000e+02 : f32
    %cst_3 = arith.constant 1.270000e+02 : f32
    %8 = vector.broadcast %cst : f32 to vector<16x128xf32>
    %9 = arith.maximumf %8, %7 : vector<16x128xf32>
    %10 = vector.broadcast %cst_3 : f32 to vector<16x128xf32>
    %11 = arith.minimumf %10, %9 : vector<16x128xf32>
    %12 = vector.broadcast %1 : f32 to vector<16x128xf32>
    %13 = arith.subf %11, %12 : vector<16x128xf32>
    %14 = vector.broadcast %0 : f32 to vector<16x128xf32>
    %15 = arith.mulf %13, %14 : vector<16x128xf32>
    %c0_4 = arith.constant 0 : index
    %c0_5 = arith.constant 0 : index
    %16 = vector.load %arg4[%c0_4, %c0_5] : memref<16x128xf32, #tpu.memory_space<vmem>>, vector<16x128xf32>
    tpu.vector_store %arg4[%c0_4, %c0_5], %15 {strides = array<i32>} : memref<16x128xf32, #tpu.memory_space<vmem>>, vector<16x128xf32>,
    return
  }
  func.func @transform_0(%arg0: i32) -> i32 {
    %c0_i32 = arith.constant 0 : i32
    %c0_i32_0 = arith.constant 0 : i32
    return %c0_i32 : i32
  }
  func.func @transform_1(%arg0: i32) -> i32 {
    %c0_i32 = arith.constant 0 : i32
    %c0_i32_0 = arith.constant 0 : i32
    return %c0_i32 : i32
  }
  func.func @transform_2(%arg0: i32) -> (i32, i32) {
    %c0_i32 = arith.constant 0 : i32
    %c0_i32_0 = arith.constant 0 : i32
    return %arg0, %c0_i32 : i32, i32
  }
  func.func @transform_3(%arg0: i32) -> (i32, i32) {
    %c0_i32 = arith.constant 0 : i32
    %c0_i32_0 = arith.constant 0 : i32
    return %arg0, %c0_i32 : i32, i32
  }
}

</mosaic_0001>

<llo_original>
// kernel: tpu_custom_call.1
$region0: #{tpu_custom_call.1}
  #allocation0 [shape = 'u32[]', space=smem, size = 0x4, offset = 0x4, fixed_abs, tag = 'smem constant byte address 0x4 - core index']
  #allocation1 [shape = 'u32[144,128]{1,0:T(1,128)}', space=vmem, size = 0x12000, scoped, tag = 'internal scratch']
  #allocation2 [shape = 'f32[1]{0:T(128)S(6)}', space=smem, size = 0x200, scoped, tag = 'scoped memory for tpu_custom_call.1']
  #allocation3 [shape = 'f32[1]{0:T(128)S(6)}', space=smem, size = 0x200, scoped, tag = 'scoped memory for tpu_custom_call.1']
  %s0 = inlined_call_operand.<no memory space> [shape: f32[1], index: 0, kind: input, shape index: {}]
  %s1 = inlined_call_operand.<no memory space> [shape: f32[1], index: 1, kind: input, shape index: {}]
  %s2 = inlined_call_operand.hbm [shape: f32[16,128], index: 2, kind: input, shape index: {}]
  %s3 = inlined_call_operand.hbm [shape: f32[16,128], index: 3, kind: output, shape index: {}]
  %s4 = sld [smem:[#allocation0]]
  $region26: #{tpu_custom_call.1} parent=0
    _
  %s6 = ssub.s32 1, %s4
  %s7 = scalar_select 0, %s6, %s4
  %8 = sst [smem:[#allocation2]] %s0
  %9 = sst [smem:[#allocation3]] %s1
  $region1: #{tpu_custom_call.1} parent=0
    #allocation4 [shape = 'u8[8192]{0}', space=vmem, size = 0x2000, scoped, tag = 'input window, operand 2, single buffered']
    #allocation5 [shape = 's32[1]{0}', space=sflag, size = 0x4, scoped, tag = 'scoped memory for tpu_custom_call.1']
    #allocation6 [shape = 's32[1]{0}', space=sflag, size = 0x4, scoped, tag = 'scoped memory for tpu_custom_call.1']
    #allocation7 [shape = 'u8[8192]{0}', space=vmem, size = 0x2000, scoped, tag = 'output window, operand 0, single buffered']
    %10 = vsyncpa [#allocation5], 0
    %11 = vsyncpa [#allocation6], 0
    // Predicated region
    $region2: #{tpu_custom_call.1} parent=1 // pred_check
      _
    $region3: #{tpu_custom_call.1} parent=1 // pred_check_branch
      %13 = sbr.rel (0) target = $region5
    $region4: #{tpu_custom_call.1} parent=1 // pred_region
      _
    $region5: #{tpu_custom_call.1} parent=1 // pred_fallthru
      _
    // Predicated region
    $region6: #{tpu_custom_call.1} parent=1 // pred_check
      _
    $region7: #{tpu_custom_call.1} parent=1 // pred_check_branch
      %15 = sbr.rel (0) target = $region9
    $region8: #{tpu_custom_call.1} parent=1 // pred_region
      _
    $region9: #{tpu_custom_call.1} parent=1 // pred_fallthru
      _
    // Predicated region
    $region10: #{tpu_custom_call.1} parent=1 // pred_check
      _
    $region11: #{tpu_custom_call.1} parent=1 // pred_check_branch
      %17 = sbr.rel (0) target = $region13
    $region12: #{tpu_custom_call.1} parent=1 // pred_region
      %s19 = ssub.s32 256, 256
      %20 = vsyncadd [#allocation5], %s19
      %s21 = sshll.u32 [#allocation4], 4
      %s22 = int_to_ptr.vmem [resolvable:$true] %s21
      %27 = dma.hbm_to_vmem [thread:$0]  %s2, 256, %s22, [#allocation5], 128, 128, 8
    $region13: #{tpu_custom_call.1} parent=1 // pred_fallthru
      _
    // Predicated region
    $region14: #{tpu_custom_call.1} parent=1 // pred_check
      _
    $region15: #{tpu_custom_call.1} parent=1 // pred_check_branch
      %29 = sbr.rel (0) target = $region17
    $region16: #{tpu_custom_call.1} parent=1 // pred_region
      %30 = dma.done [#allocation5], 256
    $region17: #{tpu_custom_call.1} parent=1 // pred_fallthru
      _
    %s31 = sld [smem:[#allocation2]]
    %s32 = sld [smem:[#allocation3]]
    %v33 = vld [vmem:[#allocation4] sm:$0xff]
    %v34 = vld [vmem:[#allocation4 + $0x8] sm:$0xff]
    %v35 = vstv %s31
    %v36 = vrcp.pop %v35
    %v37 = vmul.f32 %v33, %v36
    %v38 = vmul.f32 %v34, %v36
    %v39 = vstv %s32
    %v40 = vadd.f32 %v37, %v39
    %v41 = vadd.f32 %v38, %v39
    %v42 = vround.ne.pseudo %v40
    %v43 = vround.ne.pseudo %v41
    %v44 = vmax.f32 %v42, -128.0
    %v45 = vmax.f32 %v43, -128.0
    %v46 = vmin.f32 %v44, 127.0
    %v47 = vmin.f32 %v45, 127.0
    %v48 = vsub.f32 %v46, %v39
    %v49 = vsub.f32 %v47, %v39
    %v50 = vmul.f32 %v48, %v35
    %v51 = vmul.f32 %v49, %v35
    %52 = vst [vmem:[#allocation7] sm:$0xff] %v50
    %53 = vst [vmem:[#allocation7 + $0x8] sm:$0xff] %v51
    // Predicated region
    $region18: #{tpu_custom_call.1} parent=1 // pred_check
      _
    $region19: #{tpu_custom_call.1} parent=1 // pred_check_branch
      %55 = sbr.rel (0) target = $region21
    $region20: #{tpu_custom_call.1} parent=1 // pred_region
      %s57 = ssub.s32 256, 256
      %58 = vsyncadd [#allocation6], %s57
      %s59 = sshll.u32 [#allocation7], 4
      %s60 = int_to_ptr.vmem [resolvable:$true] %s59
      %65 = dma.vmem_to_hbm [thread:$0]  %s60, 256, %s3, [#allocation6], 128, 128, 8
    $region21: #{tpu_custom_call.1} parent=1 // pred_fallthru
      _
    // Predicated region
    $region22: #{tpu_custom_call.1} parent=1 // pred_check
      _
    $region23: #{tpu_custom_call.1} parent=1 // pred_check_branch
      %67 = sbr.rel (0) target = $region25
    $region24: #{tpu_custom_call.1} parent=1 // pred_region
      %68 = dma.done [#allocation6], 256
    $region25: #{tpu_custom_call.1} parent=1 // pred_fallthru
      _
    %69 = vsyncpa [#allocation5], 1
    %70 = vsyncpa [#allocation6], 1

</llo_original>
